<compile_context>
chip_gen: v5e
topology: v5e:2x2
jax: 0.10.0
libtpu: 0.0.40
codegen_flags: <defaults>
</compile_context>

<pallas_src>
import functools

import jax
import jax.numpy as jnp
from jax.experimental import pallas as pl
from jax.experimental.pallas import tpu as pltpu

LANE = 128


def _round_up(x: int, m: int) -> int:
    return ((x + m - 1) // m) * m


def _vmem_tile_bytes(rows: int, cols: int, itemsize: int) -> int:
    """Bytes a (rows, cols) array occupies in VMEM with (8*pack, 128) tiling."""
    sublane = 8 * (4 // itemsize)  # f32 -> 8, bf16 -> 16
    return _round_up(max(rows, 1), sublane) * _round_up(max(cols, 1), LANE) * itemsize


# ----------------------------------------------------------------------------
# Fused MLP kernel: all layers (matmul + bias + ReLU ... + sigmoid) in one body
# ----------------------------------------------------------------------------
def _fused_mlp_kernel(x_ref, *refs, num_layers):
    # refs = (w0, b0, w1, b1, ..., w_{L-1}, b_{L-1}, o_ref)
    # x_ref : (tile_m, K0) f32     w_l : (K_l, N_l) bf16     b_l : (1, N_l) f32
    # o_ref : (tile_m, N_last_pad) f32
    o_ref = refs[-1]
    h = x_ref[...]                                           # f32
    for l in range(num_layers):
        w = refs[2 * l][...]                                 # bf16
        b = refs[2 * l + 1][...]                             # f32
        # bf16 MXU operands, f32 accumulate; epilogue kept in f32.
        y = jnp.dot(h.astype(jnp.bfloat16), w,
                    preferred_element_type=jnp.float32) + b
        if l < num_layers - 1:
            h = jnp.maximum(y, 0.0)                          # ReLU (VPU, f32)
        else:
            # sigmoid(y) == 0.5*tanh(0.5*y) + 0.5 : single exact EUP push.
            h = 0.5 * jnp.tanh(0.5 * y) + 0.5
    o_ref[...] = h.astype(o_ref.dtype)


def fused_mlp_forward(x, kernel_params, out_dim, *, tile_m_max=512):
    """act(...act(x @ W0 + b0)... @ WL + bL) in a single Pallas call.

    `kernel_params` are kernel-ready: W is bf16 [K_l, N_l] (final layer's N
    lane-padded to 128), b is f32 [1, N_l].
    """
    M, K = x.shape
    num_layers = len(kernel_params)
    N_last = kernel_params[-1][0].shape[1]          # multiple of 128 (lane-dense store)
    assert K == kernel_params[0][0].shape[0], (K, kernel_params[0][0].shape)

    # ---- batch tiling -------------------------------------------------------
    if M < 16:
        # Single tile covering the full batch (block == full dim, no padding).
        tile_m = M
    else:
        # >= 2 balanced tiles: v7x megacore gets work for both TensorCores and
        # awkward batch sizes don't produce a mostly-padding last tile.
        num_tiles = max(2, pl.cdiv(M, tile_m_max))
        tile_m = _round_up(pl.cdiv(M, num_tiles), 8)

    # ---- VMEM footprint / budget -------------------------------------------
    def footprint(tm):
        byt = 0
        for w, b in kernel_params:
            byt += _vmem_tile_bytes(w.shape[0], w.shape[1], 2)   # resident bf16 W
            byt += _vmem_tile_bytes(1, b.shape[1], 4)            # resident f32 b
        byt += 2 * _vmem_tile_bytes(tm, K, 4)                    # double-buffered x tile
        byt += 2 * _vmem_tile_bytes(tm, N_last, 4)               # double-buffered out tile
        widest = max([K] + [w.shape[1] for w, _ in kernel_params])
        byt += 4 * _vmem_tile_bytes(tm, widest, 4)               # live activations / temps
        return byt

    budget = 48 << 20  # conservative: fits v7x's 64 MiB physical VMEM
    while M >= 16 and tile_m > 8 and footprint(tile_m) > budget:
        tile_m = max(8, _round_up(tile_m // 2, 8))
    # TODO(synk): if the resident weights alone exceed the budget (very large
    # hidden dims), fall back to a per-layer K/N-tiled pltpu.emit_pipeline path
    # instead of the fully-resident fused kernel.

    grid = (pl.cdiv(M, tile_m),)   # last block may be partial; Pallas masks it.

    # ---- specs --------------------------------------------------------------
    in_specs = [pl.BlockSpec((tile_m, K), lambda i: (i, 0))]
    flat_params = []
    # Static weights/biases: whole array resident in VMEM, no double-buffering.
    resident_vmem = pl.BlockSpec(memory_space=pltpu.MemorySpace.VMEM)
    for w, b in kernel_params:
        in_specs.append(resident_vmem)
        in_specs.append(resident_vmem)
        flat_params.append(w)
        flat_params.append(b)

    vmem_limit = int(min(max(1.5 * footprint(tile_m) + (4 << 20), 32 << 20),
                         100 << 20))

    # Advisory cost estimate for the XLA scheduler.
    flops = sum(2 * M * w.shape[0] * w.shape[1] for w, _ in kernel_params)
    bytes_accessed = (x.size * 4 + M * N_last * 4
                      + sum(w.size * 2 + b.size * 4 for w, b in kernel_params))
    transcendentals = M * N_last  # tanh in the final sigmoid

    kernel = functools.partial(_fused_mlp_kernel, num_layers=num_layers)
    out = pl.pallas_call(
        kernel,
        out_shape=jax.ShapeDtypeStruct((M, N_last), jnp.float32),
        grid=grid,
        in_specs=in_specs,
        out_specs=pl.BlockSpec((tile_m, N_last), lambda i: (i, 0)),
        compiler_params=pltpu.CompilerParams(
            dimension_semantics=("parallel",),   # batch tiles shard across v7x TCs
            vmem_limit_bytes=vmem_limit,
        ),
        cost_estimate=pl.CostEstimate(
            flops=flops,
            transcendentals=transcendentals,
            bytes_accessed=bytes_accessed,
        ),
    )(x, *flat_params)

    # Drop the lane padding of the final layer.
    return out[:, :out_dim]


# ----------------------------------------------------------------------------
# Model: mirrors the PyTorch NeuralNetwork module
# ----------------------------------------------------------------------------
class NeuralNetwork:
    def __init__(self, input_dim: int, num_classes: int,
                 hidden_layers_dim: list = [], key=None, tile_m_max: int = 512):
        if num_classes == 2:
            num_classes = num_classes - 1
        self.out_dim = num_classes
        self.tile_m_max = tile_m_max

        dims = [input_dim] + list(hidden_layers_dim) + [num_classes]
        num_layers = len(dims) - 1

        if key is None:
            key = jax.random.PRNGKey(0)

        self.params = []          # raw f32 (W [in,out], b [out]) - reference layout
        self.kernel_params = []   # kernel-ready (W bf16, b f32 [1, N]); final N padded to 128
        for li, (fan_in, fan_out) in enumerate(zip(dims[:-1], dims[1:])):
            key, wk, bk = jax.random.split(key, 3)
            # Deterministic init, roughly torch Linear default (+-1/sqrt(fan_in)).
            bound = 1.0 / float(fan_in) ** 0.5
            w = jax.random.uniform(wk, (fan_in, fan_out), jnp.float32,
                                   minval=-bound, maxval=bound)
            b = jax.random.uniform(bk, (fan_out,), jnp.float32,
                                   minval=-bound, maxval=bound)
            self.params.append((w, b))

            # Only the final layer's output dim is lane-padded (lane-dense HBM
            # store); hidden dims stay natural-sized (activations stay in VMEM).
            is_last = li == num_layers - 1
            n_pad = _round_up(fan_out, LANE) if is_last else fan_out
            w_k = jnp.zeros((fan_in, n_pad), jnp.bfloat16)
            w_k = w_k.at[:, :fan_out].set(w.astype(jnp.bfloat16))
            b_k = jnp.zeros((1, n_pad), jnp.float32).at[0, :fan_out].set(b)
            self.kernel_params.append((w_k, b_k))

    def __call__(self, x):
        return fused_mlp_forward(x.astype(jnp.float32), self.kernel_params,
                                 self.out_dim, tile_m_max=self.tile_m_max)


# ----------------------------------------------------------------------------
# Pure-JAX references for sanity checks
# ----------------------------------------------------------------------------
def reference_forward(params, x, *, bf16_matmul=False):
    def matmul(a, w):
        if bf16_matmul:  # mimic the kernel's bf16 MXU operands / f32 accumulate
            return jnp.dot(a.astype(jnp.bfloat16), w.astype(jnp.bfloat16),
                           preferred_element_type=jnp.float32)
        return jnp.dot(a, w)

    h = x
    for w, b in params[:-1]:
        h = jnp.maximum(matmul(h, w) + b, 0.0)
    w, b = params[-1]
    return jax.nn.sigmoid(matmul(h, w) + b)


if __name__ == "__main__":
    key = jax.random.PRNGKey(0)
    key, xkey = jax.random.split(key)

    batch = 8
    input_dim = 32
    hidden_layers_dim = [64, 32]
    num_classes = 2  # -> single sigmoid output per example

    x = jax.random.normal(xkey, (batch, input_dim), dtype=jnp.float32)

    model = NeuralNetwork(input_dim, num_classes, hidden_layers_dim, key=key)
    out = jax.block_until_ready(model(x))
    assert out.shape == (batch, 1), out.shape

    ref_matched = reference_forward(model.params, x, bf16_matmul=True)
    ref_f32 = reference_forward(model.params, x)
    assert jnp.allclose(out, ref_matched, atol=1e-3, rtol=1e-3), (
        "Pallas output mismatch vs bf16-matched reference")
    assert jnp.allclose(out, ref_f32, atol=3e-2, rtol=3e-2), (
        "Pallas output mismatch vs f32 reference")

    # No-hidden-layer branch (single Linear + sigmoid).
    model1 = NeuralNetwork(input_dim, num_classes, [], key=key)
    out1 = jax.block_until_ready(model1(x))
    ref1 = reference_forward(model1.params, x, bf16_matmul=True)
    assert out1.shape == (batch, 1), out1.shape
    assert jnp.allclose(out1, ref1, atol=1e-3, rtol=1e-3), (
        "Pallas output mismatch vs reference (single-layer)")

    # Larger, non-multiple batch: exercises the >=2-tile parallel grid and the
    # masked (partial) last block with no wrapper-side padding.
    key, xkey2 = jax.random.split(key)
    x2 = jax.random.normal(xkey2, (70, input_dim), dtype=jnp.float32)
    out2 = jax.block_until_ready(model(x2))
    ref2 = reference_forward(model.params, x2, bf16_matmul=True)
    assert out2.shape == (70, 1), out2.shape
    assert jnp.allclose(out2, ref2, atol=1e-3, rtol=1e-3), (
        "Pallas output mismatch vs reference (multi-tile batch)")

    print("KERNEL_OK")
</pallas_src>

<mosaic_0001>
module attributes {stable_mosaic.version = 11 : i64} {
  func.func @_fused_mlp_kernel(%arg0: i32, %arg1: memref<8x32xf32, #tpu.memory_space<vmem>>, %arg2: memref<32x64xbf16, #tpu.memory_space<vmem>>, %arg3: memref<1x64xf32, #tpu.memory_space<vmem>>, %arg4: memref<64x32xbf16, #tpu.memory_space<vmem>>, %arg5: memref<1x32xf32, #tpu.memory_space<vmem>>, %arg6: memref<32x128xbf16, #tpu.memory_space<vmem>>, %arg7: memref<1x128xf32, #tpu.memory_space<vmem>>, %arg8: memref<8x128xf32, #tpu.memory_space<vmem>>) attributes {dimension_semantics = [#tpu.dimension_semantics<parallel>], iteration_bounds = array<i64: 1>, scalar_prefetch = 0 : i64, scratch_operands = 0 : i64, tpu.core_type = #tpu.core_type<tc>, window_params = [{transform_indices = @transform_0, window_bounds = array<i64: 8, 32>}, {pipeline_mode = #tpu.pipeline_mode<synchronous>, transform_indices = @transform_1, window_bounds = array<i64: 32, 64>}, {pipeline_mode = #tpu.pipeline_mode<synchronous>, transform_indices = @transform_2, window_bounds = array<i64: 1, 64>}, {pipeline_mode = #tpu.pipeline_mode<synchronous>, transform_indices = @transform_3, window_bounds = array<i64: 64, 32>}, {pipeline_mode = #tpu.pipeline_mode<synchronous>, transform_indices = @transform_4, window_bounds = array<i64: 1, 32>}, {pipeline_mode = #tpu.pipeline_mode<synchronous>, transform_indices = @transform_5, window_bounds = array<i64: 32, 128>}, {pipeline_mode = #tpu.pipeline_mode<synchronous>, transform_indices = @transform_6, window_bounds = array<i64: 1, 128>}, {transform_indices = @transform_7, window_bounds = array<i64: 8, 128>}]} {
    %c0 = arith.constant 0 : index
    %c0_0 = arith.constant 0 : index
    %0 = vector.load %arg1[%c0, %c0_0] : memref<8x32xf32, #tpu.memory_space<vmem>>, vector<8x32xf32>
    %c0_1 = arith.constant 0 : index
    %c0_2 = arith.constant 0 : index
    %1 = vector.load %arg2[%c0_1, %c0_2] : memref<32x64xbf16, #tpu.memory_space<vmem>>, vector<32x64xbf16>
    %c0_3 = arith.constant 0 : index
    %c0_4 = arith.constant 0 : index
    %2 = vector.load %arg3[%c0_3, %c0_4] : memref<1x64xf32, #tpu.memory_space<vmem>>, vector<1x64xf32>
    %3 = arith.truncf %0 : vector<8x32xf32> to vector<8x32xbf16>
    %cst = arith.constant dense<0.000000e+00> : vector<8x64xf32>
    %4 = tpu.matmul %3, %1, %cst {dimension_numbers = #tpu.dot_dimension_numbers<[1], [0], [0], [1], [0, 0, 1, 1], [], []>} : vector<8x32xbf16>, vector<32x64xbf16>, vector<8x64xf32> -> vector<8x64xf32>
    %5 = vector.broadcast %2 : vector<1x64xf32> to vector<8x64xf32>
    %6 = arith.addf %4, %5 : vector<8x64xf32>
    %cst_5 = arith.constant 0.000000e+00 : f32
    %7 = vector.broadcast %cst_5 : f32 to vector<8x64xf32>
    %8 = arith.maximumf %6, %7 : vector<8x64xf32>
    %c0_6 = arith.constant 0 : index
    %c0_7 = arith.constant 0 : index
    %9 = vector.load %arg4[%c0_6, %c0_7] : memref<64x32xbf16, #tpu.memory_space<vmem>>, vector<64x32xbf16>
    %c0_8 = arith.constant 0 : index
    %c0_9 = arith.constant 0 : index
    %10 = vector.load %arg5[%c0_8, %c0_9] : memref<1x32xf32, #tpu.memory_space<vmem>>, vector<1x32xf32>
    %11 = arith.truncf %8 : vector<8x64xf32> to vector<8x64xbf16>
    %cst_10 = arith.constant dense<0.000000e+00> : vector<8x32xf32>
    %12 = tpu.matmul %11, %9, %cst_10 {dimension_numbers = #tpu.dot_dimension_numbers<[1], [0], [0], [1], [0, 0, 1, 1], [], []>} : vector<8x64xbf16>, vector<64x32xbf16>, vector<8x32xf32> -> vector<8x32xf32>
    %13 = vector.broadcast %10 : vector<1x32xf32> to vector<8x32xf32>
    %14 = arith.addf %12, %13 : vector<8x32xf32>
    %cst_11 = arith.constant 0.000000e+00 : f32
    %15 = vector.broadcast %cst_11 : f32 to vector<8x32xf32>
    %16 = arith.maximumf %14, %15 : vector<8x32xf32>
    %c0_12 = arith.constant 0 : index
    %c0_13 = arith.constant 0 : index
    %17 = vector.load %arg6[%c0_12, %c0_13] : memref<32x128xbf16, #tpu.memory_space<vmem>>, vector<32x128xbf16>
    %c0_14 = arith.constant 0 : index
    %c0_15 = arith.constant 0 : index
    %18 = vector.load %arg7[%c0_14, %c0_15] : memref<1x128xf32, #tpu.memory_space<vmem>>, vector<1x128xf32>
    %19 = arith.truncf %16 : vector<8x32xf32> to vector<8x32xbf16>
    %cst_16 = arith.constant dense<0.000000e+00> : vector<8x128xf32>
    %20 = tpu.matmul %19, %17, %cst_16 {dimension_numbers = #tpu.dot_dimension_numbers<[1], [0], [0], [1], [0, 0, 1, 1], [], []>} : vector<8x32xbf16>, vector<32x128xbf16>, vector<8x128xf32> -> vector<8x128xf32>
    %21 = vector.broadcast %18 : vector<1x128xf32> to vector<8x128xf32>
    %22 = arith.addf %20, %21 : vector<8x128xf32>
    %cst_17 = arith.constant 5.000000e-01 : f32
    %23 = vector.broadcast %cst_17 : f32 to vector<8x128xf32>
    %24 = arith.mulf %23, %22 : vector<8x128xf32>
    %25 = math.tanh %24 : vector<8x128xf32>
    %cst_18 = arith.constant 5.000000e-01 : f32
    %26 = vector.broadcast %cst_18 : f32 to vector<8x128xf32>
    %27 = arith.mulf %26, %25 : vector<8x128xf32>
    %cst_19 = arith.constant 5.000000e-01 : f32
    %28 = vector.broadcast %cst_19 : f32 to vector<8x128xf32>
    %29 = arith.addf %27, %28 : vector<8x128xf32>
    %c0_20 = arith.constant 0 : index
    %c0_21 = arith.constant 0 : index
    %30 = vector.load %arg8[%c0_20, %c0_21] : memref<8x128xf32, #tpu.memory_space<vmem>>, vector<8x128xf32>
    tpu.vector_store %arg8[%c0_20, %c0_21], %29 {strides = array<i32>} : memref<8x128xf32, #tpu.memory_space<vmem>>, vector<8x128xf32>,
    return
  }
  func.func @transform_0(%arg0: i32) -> (i32, i32) {
    %c0_i32 = arith.constant 0 : i32
    %c0_i32_0 = arith.constant 0 : i32
    return %arg0, %c0_i32 : i32, i32
  }
  func.func @transform_1(%arg0: i32) -> (i32, i32) {
    %c0_i32 = arith.constant 0 : i32
    %c0_i32_0 = arith.constant 0 : i32
    %c0_i32_1 = arith.constant 0 : i32
    return %c0_i32, %c0_i32_0 : i32, i32
  }
  func.func @transform_2(%arg0: i32) -> (i32, i32) {
    %c0_i32 = arith.constant 0 : i32
    %c0_i32_0 = arith.constant 0 : i32
    %c0_i32_1 = arith.constant 0 : i32
    return %c0_i32, %c0_i32_0 : i32, i32
  }
  func.func @transform_3(%arg0: i32) -> (i32, i32) {
    %c0_i32 = arith.constant 0 : i32
    %c0_i32_0 = arith.constant 0 : i32
    %c0_i32_1 = arith.constant 0 : i32
    return %c0_i32, %c0_i32_0 : i32, i32
  }
  func.func @transform_4(%arg0: i32) -> (i32, i32) {
    %c0_i32 = arith.constant 0 : i32
    %c0_i32_0 = arith.constant 0 : i32
    %c0_i32_1 = arith.constant 0 : i32
    return %c0_i32, %c0_i32_0 : i32, i32
  }
  func.func @transform_5(%arg0: i32) -> (i32, i32) {
    %c0_i32 = arith.constant 0 : i32
    %c0_i32_0 = arith.constant 0 : i32
    %c0_i32_1 = arith.constant 0 : i32
    return %c0_i32, %c0_i32_0 : i32, i32
  }
  func.func @transform_6(%arg0: i32) -> (i32, i32) {
    %c0_i32 = arith.constant 0 : i32
    %c0_i32_0 = arith.constant 0 : i32
    %c0_i32_1 = arith.constant 0 : i32
    return %c0_i32, %c0_i32_0 : i32, i32
  }
  func.func @transform_7(%arg0: i32) -> (i32, i32) {
    %c0_i32 = arith.constant 0 : i32
    %c0_i32_0 = arith.constant 0 : i32
    return %arg0, %c0_i32 : i32, i32
  }
}

</mosaic_0001>

<llo_original>
// kernel: tpu_custom_call.1
$region0: #{tpu_custom_call.1}
  #allocation0 [shape = 'u32[]', space=smem, size = 0x4, offset = 0x4, fixed_abs, tag = 'smem constant byte address 0x4 - core index']
  #allocation1 [shape = 'u32[72,128]{1,0:T(1,128)}', space=vmem, size = 0x9000, scoped, tag = 'internal scratch']
  %s0 = inlined_call_operand.vmem [shape: f32[8,32], index: 0, kind: input, shape index: {}]
  %s1 = inlined_call_operand.vmem [shape: bf16[32,64], index: 1, kind: input, shape index: {}]
  %s2 = inlined_call_operand.vmem [shape: f32[1,64], index: 2, kind: input, shape index: {}]
  %s3 = inlined_call_operand.vmem [shape: bf16[64,32], index: 3, kind: input, shape index: {}]
  %s4 = inlined_call_operand.vmem [shape: f32[1,32], index: 4, kind: input, shape index: {}]
  %s5 = inlined_call_operand.vmem [shape: bf16[32,128], index: 5, kind: input, shape index: {}]
  %s6 = inlined_call_operand.vmem [shape: f32[1,128], index: 6, kind: input, shape index: {}]
  %s7 = inlined_call_operand.hbm [shape: f32[8,128], index: 7, kind: output, shape index: {}]
  %s8 = sld [smem:[#allocation0]]
  $region38: #{tpu_custom_call.1} parent=0
    _
  %s10 = ssub.s32 1, %s8
  %s11 = scalar_select 0, %s10, %s8
  $region1: #{tpu_custom_call.1} parent=0
    #allocation2 [shape = 'u8[4096]{0}', space=vmem, size = 0x1000, scoped, tag = 'output window, operand 0, single buffered']
    #allocation3 [shape = 's32[1]{0}', space=sflag, size = 0x4, scoped, tag = 'scoped memory for tpu_custom_call.1']
    %12 = vsyncpa [#allocation3], 0
    // Predicated region
    $region2: #{tpu_custom_call.1} parent=1 // pred_check
      _
    $region3: #{tpu_custom_call.1} parent=1 // pred_check_branch
      %14 = sbr.rel (0) target = $region5
    $region4: #{tpu_custom_call.1} parent=1 // pred_region
      _
    $region5: #{tpu_custom_call.1} parent=1 // pred_fallthru
      _
    // Predicated region
    $region6: #{tpu_custom_call.1} parent=1 // pred_check
      _
    $region7: #{tpu_custom_call.1} parent=1 // pred_check_branch
      %16 = sbr.rel (0) target = $region9
    $region8: #{tpu_custom_call.1} parent=1 // pred_region
      _
    $region9: #{tpu_custom_call.1} parent=1 // pred_fallthru
      _
    // Predicated region
    $region10: #{tpu_custom_call.1} parent=1 // pred_check
      _
    $region11: #{tpu_custom_call.1} parent=1 // pred_check_branch
      %18 = sbr.rel (0) target = $region13
    $region12: #{tpu_custom_call.1} parent=1 // pred_region
      _
    $region13: #{tpu_custom_call.1} parent=1 // pred_fallthru
      _
    // Predicated region
    $region14: #{tpu_custom_call.1} parent=1 // pred_check
      _
    $region15: #{tpu_custom_call.1} parent=1 // pred_check_branch
      %20 = sbr.rel (0) target = $region17
    $region16: #{tpu_custom_call.1} parent=1 // pred_region
      _
    $region17: #{tpu_custom_call.1} parent=1 // pred_fallthru
      _
    // Predicated region
    $region18: #{tpu_custom_call.1} parent=1 // pred_check
      _
    $region19: #{tpu_custom_call.1} parent=1 // pred_check_branch
      %22 = sbr.rel (0) target = $region21
    $region20: #{tpu_custom_call.1} parent=1 // pred_region
      _
    $region21: #{tpu_custom_call.1} parent=1 // pred_fallthru
      _
    // Predicated region
    $region22: #{tpu_custom_call.1} parent=1 // pred_check
      _
    $region23: #{tpu_custom_call.1} parent=1 // pred_check_branch
      %24 = sbr.rel (0) target = $region25
    $region24: #{tpu_custom_call.1} parent=1 // pred_region
      _
    $region25: #{tpu_custom_call.1} parent=1 // pred_fallthru
      _
    // Predicated region
    $region26: #{tpu_custom_call.1} parent=1 // pred_check
      _
    $region27: #{tpu_custom_call.1} parent=1 // pred_check_branch
      %26 = sbr.rel (0) target = $region29
    $region28: #{tpu_custom_call.1} parent=1 // pred_region
      _
    $region29: #{tpu_custom_call.1} parent=1 // pred_fallthru
      _
    %v28 = vld [vmem:[%s0] sm:$0xff]
    %v29 = vld [vmem:[%s1] sm:$0xf]
    %v30 = vld [vmem:[%s1 + $0x4] sm:$0xf]
    %v31 = vld [vmem:[%s1 + $0x8] sm:$0xf]
    %v32 = vld [vmem:[%s1 + $0xc] sm:$0xf]
    %v33 = vld [vmem:[%s2] sm:$0x1]
    %v34 = vpack.c.bf16 %v28, %v28
    %v36 = vperm.slane %v33, 0
    %v42 = vunpack.c.l.b16 %v29
    %v43 = vunpack.c.l.b16 %v30
    %v44 = vunpack.c.l.b16 %v31
    %v45 = vunpack.c.l.b16 %v32
    %v46 = vpack.c.b16 %v43, %v42
    %v47 = vpack.c.b16 %v45, %v44
    %vm50 = vcmask 261120
    %v52 = vsel %vm50, %v34, 0
    %54 = vmatpush.bf16.msra.mxu0 0
    %55 = vmatpush.bf16.msra.mxu0 0
    %56 = vmatpush.bf16.msra.mxu0 0
    %57 = vmatpush.bf16.msra.mxu0 0
    %58 = vmatpush.bf16.msra.mxu0 0
    %59 = vmatpush.bf16.msra.mxu0 0
    %60 = vmatpush.bf16.msra.mxu0 %v47
    %61 = vmatpush.bf16.msra.mxu0 %v46
    %62 = vmatmul.bf16.gmra.mxu0 %v52
    %v63 = vpop.f32.mrf.mxu0
    %v64 = vadd.f32 %v36, %v63
    %v65 = vpop.f32.mrf.mxu0
    %66 = vdwg.mxu0
    %v67 = vmax.f32 %v64, 0.0
    %v68 = vld [vmem:[%s3] sm:$0xf]
    %v69 = vld [vmem:[%s3 + $0x4] sm:$0xf]
    %v70 = vld [vmem:[%s3 + $0x8] sm:$0xf]
    %v71 = vld [vmem:[%s3 + $0xc] sm:$0xf]
    %v72 = vld [vmem:[%s3 + $0x10] sm:$0xf]
    %v73 = vld [vmem:[%s3 + $0x14] sm:$0xf]
    %v74 = vld [vmem:[%s3 + $0x18] sm:$0xf]
    %v75 = vld [vmem:[%s3 + $0x1c] sm:$0xf]
    %v76 = vld [vmem:[%s4] sm:$0x1]
    %v77 = vpack.c.bf16 %v67, %v67
    %v79 = vperm.slane %v76, 0
    %v89 = vunpack.c.l.b16 %v68
    %v90 = vunpack.c.l.b16 %v69
    %v91 = vunpack.c.l.b16 %v70
    %v92 = vunpack.c.l.b16 %v71
    %v93 = vunpack.c.l.b16 %v72
    %v94 = vunpack.c.l.b16 %v73
    %v95 = vunpack.c.l.b16 %v74
    %v96 = vunpack.c.l.b16 %v75
    %v97 = vpack.c.b16 %v90, %v89
    %v98 = vpack.c.b16 %v92, %v91
    %v99 = vpack.c.b16 %v94, %v93
    %v100 = vpack.c.b16 %v96, %v95
    %vm105 = vcmask 523264
    %v107 = vsel %vm105, %v77, 0
    %109 = vmatpush.bf16.msra.mxu0 0
    %110 = vmatpush.bf16.msra.mxu0 0
    %111 = vmatpush.bf16.msra.mxu0 0
    %112 = vmatpush.bf16.msra.mxu0 0
    %113 = vmatpush.bf16.msra.mxu0 %v100
    %114 = vmatpush.bf16.msra.mxu0 %v99
    %115 = vmatpush.bf16.msra.mxu0 %v98
    %116 = vmatpush.bf16.msra.mxu0 %v97
    %117 = vmatmul.bf16.gmra.mxu0 %v107
    %v118 = vpop.f32.mrf.mxu0
    %v119 = vadd.f32 %v79, %v118
    %v120 = vpop.f32.mrf.mxu0
    %121 = vdwg.mxu0
    %v122 = vmax.f32 %v119, 0.0
    %v123 = vld [vmem:[%s5] sm:$0xf]
    %v124 = vld [vmem:[%s5 + $0x4] sm:$0xf]
    %v125 = vld [vmem:[%s5 + $0x8] sm:$0xf]
    %v126 = vld [vmem:[%s5 + $0xc] sm:$0xf]
    %v127 = vld [vmem:[%s6] sm:$0x1]
    %v128 = vpack.c.bf16 %v122, %v122
    %v130 = vperm.slane %v127, 0
    %v136 = vunpack.c.l.b16 %v123
    %v137 = vunpack.c.l.b16 %v124
    %v138 = vunpack.c.l.b16 %v125
    %v139 = vunpack.c.l.b16 %v126
    %v140 = vpack.c.b16 %v137, %v136
    %v141 = vpack.c.b16 %v139, %v138
    %v145 = vsel %vm50, %v128, 0
    %147 = vmatpush.bf16.msra.mxu0 0
    %148 = vmatpush.bf16.msra.mxu0 0
    %149 = vmatpush.bf16.msra.mxu0 0
    %150 = vmatpush.bf16.msra.mxu0 0
    %151 = vmatpush.bf16.msra.mxu0 0
    %152 = vmatpush.bf16.msra.mxu0 0
    %153 = vmatpush.bf16.msra.mxu0 %v141
    %154 = vmatpush.bf16.msra.mxu0 %v140
    %155 = vmatmul.bf16.gmra.mxu0 %v145
    %v156 = vpop.f32.mrf.mxu0
    %v157 = vadd.f32 %v130, %v156
    %v158 = vpop.f32.mrf.mxu0
    %159 = vdwg.mxu0
    %v160 = vmul.f32 %v157, 0.5
    %v161 = vtanh.pop %v160
    %v162 = vmul.f32 %v161, 0.5
    %v163 = vadd.f32 %v162, 0.5
    %164 = vst [vmem:[#allocation2] sm:$0xff] %v163
    // Predicated region
    $region30: #{tpu_custom_call.1} parent=1 // pred_check
      _
    $region31: #{tpu_custom_call.1} parent=1 // pred_check_branch
      %166 = sbr.rel (0) target = $region33
    $region32: #{tpu_custom_call.1} parent=1 // pred_region
      %168 = vsyncadd [#allocation3], 0
      %s170 = sshll.u32 [#allocation2], 4
      %s171 = int_to_ptr.vmem [resolvable:$true] %s170
      %s172 = sshll.u32 %s7, 4
      %s173 = int_to_ptr.hbm [resolvable:$true] %s172
      %175 = dma.vmem_to_hbm [thread:$0]  %s171, 128, %s173, [#allocation3]
    $region33: #{tpu_custom_call.1} parent=1 // pred_fallthru
      _
    // Predicated region
    $region34: #{tpu_custom_call.1} parent=1 // pred_check
      _
    $region35: #{tpu_custom_call.1} parent=1 // pred_check_branch
      %177 = sbr.rel (0) target = $region37
    $region36: #{tpu_custom_call.1} parent=1 // pred_region
      %179 = dma.done [#allocation3], 128
    $region37: #{tpu_custom_call.1} parent=1 // pred_fallthru
      _
    %180 = vsyncpa [#allocation3], 1

</llo_original>
